<compile_context>
chip_gen: v6e
topology: v6e:2x2x1
jax: 0.10.0
libtpu: 0.0.40
codegen_flags: <defaults>
</compile_context>

<pallas_src>
import functools

import jax
import jax.numpy as jnp
from jax.experimental import pallas as pl
from jax.experimental.pallas import tpu as pltpu

TASK_NUM = 2  # the reference module reads a global `task_num`; fixed here.


# ---------------------------------------------------------------------------
# Fused kernel: shared layer + the one tower owning this batch tile.
# Everything is laid out batch-on-lanes: tiles are (features, tb).
# ---------------------------------------------------------------------------
def _mtlnet_kernel(x_ref, w1t_ref, b1_ref, w2t_ref, b2_ref,
                   tw1t_ref, tb1_ref, tw2t_ref, tb2_ref, out_ref,
                   *, use_bf16_matmul):
    def sigmoid(z):
        # exp and the approximate reciprocal both use the EUP slot.
        return pl.reciprocal(1.0 + jnp.exp(-z), approx=True)

    if use_bf16_matmul:
        # Weights (and x) arrive pre-cast to bf16 from the wrapper; only the
        # per-tile activations are cast here. f32 accumulation via the MXU.
        def dot(w, a):
            return jnp.dot(w, a.astype(jnp.bfloat16),
                           preferred_element_type=jnp.float32)
    else:
        # Default MXU precision (no HIGHEST multi-pass tax).
        def dot(w, a):
            return jnp.dot(w, a, preferred_element_type=jnp.float32)

    x = x_ref[...]                                           # (F,  tb)
    a1 = sigmoid(dot(w1t_ref[...], x) + b1_ref[...])         # (H1, tb)
    h = sigmoid(dot(w2t_ref[...], a1) + b2_ref[...])         # (H2, tb)
    t1 = sigmoid(dot(tw1t_ref[...], h) + tb1_ref[...])       # (TI, tb)
    out_ref[...] = dot(tw2t_ref[...], t1) + tb2_ref[...]     # (TO, tb)


def _round_up(n, m):
    return ((n + m - 1) // m) * m


def _pick_lane_tile(ts_pad):
    """Largest multiple-of-128 tile <= 2048 that divides ts_pad."""
    tb = min(ts_pad, 2048)
    while ts_pad % tb != 0:
        tb -= 128
    return tb


# ---------------------------------------------------------------------------
# Full forward, equivalent to mtlnet.forward. Returns a list of per-task
# (tower_size, tower_output_size) outputs.
# ---------------------------------------------------------------------------
@functools.partial(jax.jit,
                   static_argnames=("task_num", "use_bf16_matmul", "lane_tile"))
def mtlnet_forward(x, params, task_num=TASK_NUM, *,
                   use_bf16_matmul=False, lane_tile=None):
    B, F = x.shape
    if B % task_num != 0:
        raise ValueError(f"batch {B} must be divisible by task_num {task_num}")
    T = task_num
    ts = B // T

    w1, b1, w2, b2 = params["w1"], params["b1"], params["w2"], params["b2"]
    H1, H2 = w1.shape[1], w2.shape[1]
    tw1 = params["tw1"]                      # (T, H2, TI)
    if tw1.shape[0] != T:
        raise ValueError("stacked tower params do not match task_num")
    TI = tw1.shape[-1]
    TO = params["tw2"].shape[-1]

    # ---- batch-on-lanes parameter layout (transposed weights, column biases).
    w1t = w1.T                                           # (H1, F)
    w2t = w2.T                                           # (H2, H1)
    b1c = b1.reshape(H1, 1)
    b2c = b2.reshape(H2, 1)
    tw1t = jnp.transpose(tw1, (0, 2, 1))                 # (T, TI, H2)
    tw2t = jnp.transpose(params["tw2"], (0, 2, 1))       # (T, TO, TI)
    tb1c = params["tb1"].reshape(T, TI, 1)
    tb2c = params["tb2"].reshape(T, TO, 1)

    # ---- per-task, batch-on-lanes input, padded to a multiple of 128 lanes.
    ts_pad = _round_up(ts, 128)
    xt = jnp.transpose(x.reshape(T, ts, F), (0, 2, 1))   # (T, F, ts)
    if ts_pad != ts:
        xt = jnp.pad(xt, ((0, 0), (0, 0), (0, ts_pad - ts)))

    if use_bf16_matmul:
        xt = xt.astype(jnp.bfloat16)
        w1t = w1t.astype(jnp.bfloat16)
        w2t = w2t.astype(jnp.bfloat16)
        tw1t = tw1t.astype(jnp.bfloat16)
        tw2t = tw2t.astype(jnp.bfloat16)

    tb = lane_tile if lane_tile is not None else _pick_lane_tile(ts_pad)
    if ts_pad % tb != 0 or tb % 128 != 0:
        raise ValueError(f"lane tile {tb} incompatible with padded task rows {ts_pad}")
    grid = (T, ts_pad // tb)

    resident = lambda t, j: (0, 0)        # shared weights: same block every step
    per_task = lambda t, j: (t, 0, 0)     # tower weights: pick this tile's tower
    x_map = lambda t, j: (t, 0, j)

    weight_bytes = 4 * (F * H1 + H1 + H1 * H2 + H2
                        + T * (H2 * TI + TI + TI * TO + TO))
    cost = pl.CostEstimate(
        flops=2 * T * ts_pad * (F * H1 + H1 * H2 + H2 * TI + TI * TO),
        transcendentals=T * ts_pad * (H1 + H2 + TI),
        bytes_accessed=4 * T * ts_pad * (F + TO) + weight_bytes,
    )

    slab = pl.pallas_call(
        functools.partial(_mtlnet_kernel, use_bf16_matmul=use_bf16_matmul),
        out_shape=jax.ShapeDtypeStruct((T, TO, ts_pad), jnp.float32),
        grid=grid,
        in_specs=[
            pl.BlockSpec((pl.Squeezed(), F, tb), x_map),       # x tile (F, tb)
            pl.BlockSpec((H1, F), resident),                   # shared W1^T
            pl.BlockSpec((H1, 1), resident),                   # shared b1
            pl.BlockSpec((H2, H1), resident),                  # shared W2^T
            pl.BlockSpec((H2, 1), resident),                   # shared b2
            pl.BlockSpec((pl.Squeezed(), TI, H2), per_task),   # tower t W1^T
            pl.BlockSpec((pl.Squeezed(), TI, 1), per_task),    # tower t b1
            pl.BlockSpec((pl.Squeezed(), TO, TI), per_task),   # tower t W2^T
            pl.BlockSpec((pl.Squeezed(), TO, 1), per_task),    # tower t b2
        ],
        out_specs=pl.BlockSpec((pl.Squeezed(), TO, tb), x_map),
        compiler_params=pltpu.CompilerParams(
            dimension_semantics=("parallel", "parallel"),
            vmem_limit_bytes=32 * 1024 * 1024,
        ),
        cost_estimate=cost,
    )(xt, w1t, b1c, w2t, b2c, tw1t, tb1c, tw2t, tb2c)

    # out_t = tower_t(h)[ts*t:ts*(t+1)]  ->  slab[t, :, :ts].T
    return [slab[t, :, :ts].T for t in range(T)]


# ---------------------------------------------------------------------------
# Pure-JAX reference (matches PyTorch semantics) for the sanity check.
# ---------------------------------------------------------------------------
def mtlnet_reference(x, params, task_num=TASK_NUM):
    hp = jax.lax.Precision.HIGHEST
    h = jax.nn.sigmoid(jnp.dot(x, params["w1"], precision=hp) + params["b1"])
    h = jax.nn.sigmoid(jnp.dot(h, params["w2"], precision=hp) + params["b2"])
    ts = x.shape[0] // task_num
    outs = []
    for t in range(task_num):
        a = jax.nn.sigmoid(jnp.dot(h, params["tw1"][t], precision=hp)
                           + params["tb1"][t, 0])
        o = jnp.dot(a, params["tw2"][t], precision=hp) + params["tb2"][t, 0]
        outs.append(o[ts * t:ts * (t + 1)])
    return outs


if __name__ == "__main__":
    # Small shapes consistent with the module's constructor arguments.
    batch = 16                      # divisible by TASK_NUM (tower_size = 8)
    input_features = 16
    shared_layer_first = 32
    shared_layer_second = 32
    tower_input_size = 16
    tower_output_size = 8

    key = jax.random.PRNGKey(0)
    ks = jax.random.split(key, 9)
    scale = 0.1
    params = {
        "w1": scale * jax.random.normal(ks[0], (input_features, shared_layer_first), jnp.float32),
        "b1": scale * jax.random.normal(ks[1], (1, shared_layer_first), jnp.float32),
        "w2": scale * jax.random.normal(ks[2], (shared_layer_first, shared_layer_second), jnp.float32),
        "b2": scale * jax.random.normal(ks[3], (1, shared_layer_second), jnp.float32),
        # stacked tower params: leading axis = task index
        "tw1": scale * jax.random.normal(ks[4], (TASK_NUM, shared_layer_second, tower_input_size), jnp.float32),
        "tb1": scale * jax.random.normal(ks[5], (TASK_NUM, 1, tower_input_size), jnp.float32),
        "tw2": scale * jax.random.normal(ks[6], (TASK_NUM, tower_input_size, tower_output_size), jnp.float32),
        "tb2": scale * jax.random.normal(ks[7], (TASK_NUM, 1, tower_output_size), jnp.float32),
    }

    x = jax.random.normal(ks[8], (batch, input_features), jnp.float32)

    refs = mtlnet_reference(x, params)
    tower_size = batch // TASK_NUM

    # f32 path (default MXU precision; approx-reciprocal sigmoid).
    outs = mtlnet_forward(x, params)
    outs = [jax.block_until_ready(o) for o in outs]
    for o, r in zip(outs, refs):
        assert o.shape == (tower_size, tower_output_size), o.shape
        assert o.shape == r.shape, (o.shape, r.shape)
        err = float(jnp.max(jnp.abs(o - r)))
        assert err < 2e-2, err

    # bf16 MXU path (pre-cast weights/x; f32 accumulation) — looser tolerance.
    outs_bf16 = mtlnet_forward(x, params, use_bf16_matmul=True)
    outs_bf16 = [jax.block_until_ready(o) for o in outs_bf16]
    for o, r in zip(outs_bf16, refs):
        assert o.shape == r.shape, (o.shape, r.shape)
        err = float(jnp.max(jnp.abs(o - r)))
        assert err < 3e-2, err

    print("KERNEL_OK")
</pallas_src>

<mosaic_0001>
module attributes {stable_mosaic.version = 11 : i64} {
  func.func @_mtlnet_kernel(%arg0: i32, %arg1: i32, %arg2: memref<1x16x128xf32, #tpu.memory_space<vmem>>, %arg3: memref<32x16xf32, #tpu.memory_space<vmem>>, %arg4: memref<32x1xf32, #tpu.memory_space<vmem>>, %arg5: memref<32x32xf32, #tpu.memory_space<vmem>>, %arg6: memref<32x1xf32, #tpu.memory_space<vmem>>, %arg7: memref<1x16x32xf32, #tpu.memory_space<vmem>>, %arg8: memref<1x16x1xf32, #tpu.memory_space<vmem>>, %arg9: memref<1x8x16xf32, #tpu.memory_space<vmem>>, %arg10: memref<1x8x1xf32, #tpu.memory_space<vmem>>, %arg11: memref<1x8x128xf32, #tpu.memory_space<vmem>>) attributes {dimension_semantics = [#tpu.dimension_semantics<parallel>, #tpu.dimension_semantics<parallel>], iteration_bounds = array<i64: 2, 1>, scalar_prefetch = 0 : i64, scratch_operands = 0 : i64, tpu.core_type = #tpu.core_type<tc>, window_params = [{transform_indices = @transform_0, window_bounds = array<i64: 1, 16, 128>}, {pipeline_mode = #tpu.pipeline_mode<synchronous>, transform_indices = @transform_1, window_bounds = array<i64: 32, 16>}, {pipeline_mode = #tpu.pipeline_mode<synchronous>, transform_indices = @transform_2, window_bounds = array<i64: 32, 1>}, {pipeline_mode = #tpu.pipeline_mode<synchronous>, transform_indices = @transform_3, window_bounds = array<i64: 32, 32>}, {pipeline_mode = #tpu.pipeline_mode<synchronous>, transform_indices = @transform_4, window_bounds = array<i64: 32, 1>}, {transform_indices = @transform_5, window_bounds = array<i64: 1, 16, 32>}, {transform_indices = @transform_6, window_bounds = array<i64: 1, 16, 1>}, {transform_indices = @transform_7, window_bounds = array<i64: 1, 8, 16>}, {transform_indices = @transform_8, window_bounds = array<i64: 1, 8, 1>}, {transform_indices = @transform_9, window_bounds = array<i64: 1, 8, 128>}]} {
    %c0 = arith.constant 0 : index
    %c0_0 = arith.constant 0 : index
    %c0_1 = arith.constant 0 : index
    %0 = vector.load %arg2[%c0, %c0_0, %c0_1] : memref<1x16x128xf32, #tpu.memory_space<vmem>>, vector<1x16x128xf32>
    %1 = vector.shape_cast %0 : vector<1x16x128xf32> to vector<16x128xf32>
    %c0_2 = arith.constant 0 : index
    %c0_3 = arith.constant 0 : index
    %2 = vector.load %arg3[%c0_2, %c0_3] : memref<32x16xf32, #tpu.memory_space<vmem>>, vector<32x16xf32>
    %cst = arith.constant dense<0.000000e+00> : vector<32x128xf32>
    %3 = tpu.matmul %2, %1, %cst {dimension_numbers = #tpu.dot_dimension_numbers<[1], [0], [0], [1], [0, 0, 1, 1], [], []>} : vector<32x16xf32>, vector<16x128xf32>, vector<32x128xf32> -> vector<32x128xf32>
    %c0_4 = arith.constant 0 : index
    %c0_5 = arith.constant 0 : index
    %4 = vector.load %arg4[%c0_4, %c0_5] : memref<32x1xf32, #tpu.memory_space<vmem>>, vector<32x1xf32>
    %5 = vector.broadcast %4 : vector<32x1xf32> to vector<32x128xf32>
    %6 = arith.addf %3, %5 : vector<32x128xf32>
    %cst_6 = arith.constant 0.000000e+00 : f32
    %7 = vector.broadcast %cst_6 : f32 to vector<32x128xf32>
    %8 = arith.subf %7, %6 : vector<32x128xf32>
    %9 = math.exp %8 : vector<32x128xf32>
    %cst_7 = arith.constant 1.000000e+00 : f32
    %10 = vector.broadcast %cst_7 : f32 to vector<32x128xf32>
    %11 = arith.addf %10, %9 : vector<32x128xf32>
    %12 = tpu.reciprocal %11 {approx = true} : vector<32x128xf32> -> vector<32x128xf32>
    %c0_8 = arith.constant 0 : index
    %c0_9 = arith.constant 0 : index
    %13 = vector.load %arg5[%c0_8, %c0_9] : memref<32x32xf32, #tpu.memory_space<vmem>>, vector<32x32xf32>
    %cst_10 = arith.constant dense<0.000000e+00> : vector<32x128xf32>
    %14 = tpu.matmul %13, %12, %cst_10 {dimension_numbers = #tpu.dot_dimension_numbers<[1], [0], [0], [1], [0, 0, 1, 1], [], []>} : vector<32x32xf32>, vector<32x128xf32>, vector<32x128xf32> -> vector<32x128xf32>
    %c0_11 = arith.constant 0 : index
    %c0_12 = arith.constant 0 : index
    %15 = vector.load %arg6[%c0_11, %c0_12] : memref<32x1xf32, #tpu.memory_space<vmem>>, vector<32x1xf32>
    %16 = vector.broadcast %15 : vector<32x1xf32> to vector<32x128xf32>
    %17 = arith.addf %14, %16 : vector<32x128xf32>
    %cst_13 = arith.constant 0.000000e+00 : f32
    %18 = vector.broadcast %cst_13 : f32 to vector<32x128xf32>
    %19 = arith.subf %18, %17 : vector<32x128xf32>
    %20 = math.exp %19 : vector<32x128xf32>
    %cst_14 = arith.constant 1.000000e+00 : f32
    %21 = vector.broadcast %cst_14 : f32 to vector<32x128xf32>
    %22 = arith.addf %21, %20 : vector<32x128xf32>
    %23 = tpu.reciprocal %22 {approx = true} : vector<32x128xf32> -> vector<32x128xf32>
    %c0_15 = arith.constant 0 : index
    %c0_16 = arith.constant 0 : index
    %c0_17 = arith.constant 0 : index
    %24 = vector.load %arg7[%c0_15, %c0_16, %c0_17] : memref<1x16x32xf32, #tpu.memory_space<vmem>>, vector<1x16x32xf32>
    %25 = vector.shape_cast %24 : vector<1x16x32xf32> to vector<16x32xf32>
    %cst_18 = arith.constant dense<0.000000e+00> : vector<16x128xf32>
    %26 = tpu.matmul %25, %23, %cst_18 {dimension_numbers = #tpu.dot_dimension_numbers<[1], [0], [0], [1], [0, 0, 1, 1], [], []>} : vector<16x32xf32>, vector<32x128xf32>, vector<16x128xf32> -> vector<16x128xf32>
    %c0_19 = arith.constant 0 : index
    %c0_20 = arith.constant 0 : index
    %c0_21 = arith.constant 0 : index
    %27 = vector.load %arg8[%c0_19, %c0_20, %c0_21] : memref<1x16x1xf32, #tpu.memory_space<vmem>>, vector<1x16x1xf32>
    %28 = vector.shape_cast %27 : vector<1x16x1xf32> to vector<16x1xf32>
    %29 = vector.broadcast %28 : vector<16x1xf32> to vector<16x128xf32>
    %30 = arith.addf %26, %29 : vector<16x128xf32>
    %cst_22 = arith.constant 0.000000e+00 : f32
    %31 = vector.broadcast %cst_22 : f32 to vector<16x128xf32>
    %32 = arith.subf %31, %30 : vector<16x128xf32>
    %33 = math.exp %32 : vector<16x128xf32>
    %cst_23 = arith.constant 1.000000e+00 : f32
    %34 = vector.broadcast %cst_23 : f32 to vector<16x128xf32>
    %35 = arith.addf %34, %33 : vector<16x128xf32>
    %36 = tpu.reciprocal %35 {approx = true} : vector<16x128xf32> -> vector<16x128xf32>
    %c0_24 = arith.constant 0 : index
    %c0_25 = arith.constant 0 : index
    %c0_26 = arith.constant 0 : index
    %37 = vector.load %arg9[%c0_24, %c0_25, %c0_26] : memref<1x8x16xf32, #tpu.memory_space<vmem>>, vector<1x8x16xf32>
    %38 = vector.shape_cast %37 : vector<1x8x16xf32> to vector<8x16xf32>
    %cst_27 = arith.constant dense<0.000000e+00> : vector<8x128xf32>
    %39 = tpu.matmul %38, %36, %cst_27 {dimension_numbers = #tpu.dot_dimension_numbers<[1], [0], [0], [1], [0, 0, 1, 1], [], []>} : vector<8x16xf32>, vector<16x128xf32>, vector<8x128xf32> -> vector<8x128xf32>
    %c0_28 = arith.constant 0 : index
    %c0_29 = arith.constant 0 : index
    %c0_30 = arith.constant 0 : index
    %40 = vector.load %arg10[%c0_28, %c0_29, %c0_30] : memref<1x8x1xf32, #tpu.memory_space<vmem>>, vector<1x8x1xf32>
    %41 = vector.shape_cast %40 : vector<1x8x1xf32> to vector<8x1xf32>
    %42 = vector.broadcast %41 : vector<8x1xf32> to vector<8x128xf32>
    %43 = arith.addf %39, %42 : vector<8x128xf32>
    %c0_31 = arith.constant 0 : index
    %c0_32 = arith.constant 0 : index
    %c0_33 = arith.constant 0 : index
    %44 = vector.load %arg11[%c0_31, %c0_32, %c0_33] : memref<1x8x128xf32, #tpu.memory_space<vmem>>, vector<1x8x128xf32>
    %45 = vector.shape_cast %44 : vector<1x8x128xf32> to vector<8x128xf32>
    %46 = vector.shape_cast %43 : vector<8x128xf32> to vector<1x8x128xf32>
    tpu.vector_store %arg11[%c0_31, %c0_32, %c0_33], %46 {strides = array<i32>} : memref<1x8x128xf32, #tpu.memory_space<vmem>>, vector<1x8x128xf32>,
    return
  }
  func.func @transform_0(%arg0: i32, %arg1: i32) -> (i32, i32, i32) {
    %c0_i32 = arith.constant 0 : i32
    %c0_i32_0 = arith.constant 0 : i32
    return %arg0, %c0_i32, %arg1 : i32, i32, i32
  }
  func.func @transform_1(%arg0: i32, %arg1: i32) -> (i32, i32) {
    %c0_i32 = arith.constant 0 : i32
    %c0_i32_0 = arith.constant 0 : i32
    %c0_i32_1 = arith.constant 0 : i32
    return %c0_i32, %c0_i32_0 : i32, i32
  }
  func.func @transform_2(%arg0: i32, %arg1: i32) -> (i32, i32) {
    %c0_i32 = arith.constant 0 : i32
    %c0_i32_0 = arith.constant 0 : i32
    %c0_i32_1 = arith.constant 0 : i32
    return %c0_i32, %c0_i32_0 : i32, i32
  }
  func.func @transform_3(%arg0: i32, %arg1: i32) -> (i32, i32) {
    %c0_i32 = arith.constant 0 : i32
    %c0_i32_0 = arith.constant 0 : i32
    %c0_i32_1 = arith.constant 0 : i32
    return %c0_i32, %c0_i32_0 : i32, i32
  }
  func.func @transform_4(%arg0: i32, %arg1: i32) -> (i32, i32) {
    %c0_i32 = arith.constant 0 : i32
    %c0_i32_0 = arith.constant 0 : i32
    %c0_i32_1 = arith.constant 0 : i32
    return %c0_i32, %c0_i32_0 : i32, i32
  }
  func.func @transform_5(%arg0: i32, %arg1: i32) -> (i32, i32, i32) {
    %c0_i32 = arith.constant 0 : i32
    %c0_i32_0 = arith.constant 0 : i32
    %c0_i32_1 = arith.constant 0 : i32
    return %arg0, %c0_i32, %c0_i32_0 : i32, i32, i32
  }
  func.func @transform_6(%arg0: i32, %arg1: i32) -> (i32, i32, i32) {
    %c0_i32 = arith.constant 0 : i32
    %c0_i32_0 = arith.constant 0 : i32
    %c0_i32_1 = arith.constant 0 : i32
    return %arg0, %c0_i32, %c0_i32_0 : i32, i32, i32
  }
  func.func @transform_7(%arg0: i32, %arg1: i32) -> (i32, i32, i32) {
    %c0_i32 = arith.constant 0 : i32
    %c0_i32_0 = arith.constant 0 : i32
    %c0_i32_1 = arith.constant 0 : i32
    return %arg0, %c0_i32, %c0_i32_0 : i32, i32, i32
  }
  func.func @transform_8(%arg0: i32, %arg1: i32) -> (i32, i32, i32) {
    %c0_i32 = arith.constant 0 : i32
    %c0_i32_0 = arith.constant 0 : i32
    %c0_i32_1 = arith.constant 0 : i32
    return %arg0, %c0_i32, %c0_i32_0 : i32, i32, i32
  }
  func.func @transform_9(%arg0: i32, %arg1: i32) -> (i32, i32, i32) {
    %c0_i32 = arith.constant 0 : i32
    %c0_i32_0 = arith.constant 0 : i32
    return %arg0, %c0_i32, %arg1 : i32, i32, i32
  }
}

</mosaic_0001>

<llo_original>
// kernel: mtlnet_forward.1
$region0: #{mtlnet_forward.1}
  #allocation0 [shape = 'u32[]', space=smem, size = 0x4, offset = 0x4, fixed_abs, tag = 'smem constant byte address 0x4 - core index']
  #allocation1 [shape = 'u32[144,128]{1,0:T(1,128)}', space=vmem, size = 0x12000, scoped, tag = 'internal scratch']
  %s0 = inlined_call_operand.vmem [shape: f32[2,16,128], index: 0, kind: input, shape index: {}]
  %s1 = inlined_call_operand.vmem [shape: f32[32,16], index: 1, kind: input, shape index: {}]
  %s2 = inlined_call_operand.vmem [shape: f32[32,1], index: 2, kind: input, shape index: {}]
  %s3 = inlined_call_operand.vmem [shape: f32[32,32], index: 3, kind: input, shape index: {}]
  %s4 = inlined_call_operand.vmem [shape: f32[32,1], index: 4, kind: input, shape index: {}]
  %s5 = inlined_call_operand.vmem [shape: f32[2,16,32], index: 5, kind: input, shape index: {}]
  %s6 = inlined_call_operand.vmem [shape: f32[2,16,1], index: 6, kind: input, shape index: {}]
  %s7 = inlined_call_operand.vmem [shape: f32[2,8,16], index: 7, kind: input, shape index: {}]
  %s8 = inlined_call_operand.vmem [shape: f32[2,8,1], index: 8, kind: input, shape index: {}]
  %s9 = inlined_call_operand.vmem [shape: f32[2,8,128], index: 9, kind: output, shape index: {}]
  %s10 = sld [smem:[#allocation0]]
  $region69: #{mtlnet_forward.1} parent=0
    _
  %s12 = ssub.s32 1, %s10
  %s13 = scalar_select 0, %s12, %s10
  loop: start=0, step=1, limit=4
  $region2: #{mtlnet_forward.1} parent=0 // loop_pre_header
    _
  $region3: #{mtlnet_forward.1} parent=0 // loop_header
    %s15 = sphi 0, %s19
    %p16 = scmp.ge.s32.totalorder %s15, 4
    %s22 = sphi 0, %s34
    %s23 = sphi 0, %s30
    %s24 = sphi 0, %s22
    %s25 = sphi 0, %s23
    %s26 = sphi 0, %s24
    %s27 = sphi 0, %s25
    %s39 = sphi 0, %s41
    %s42 = sphi 0, %s39
    %s43 = sphi 0, %s42
    %s59 = sphi 0, %s43
    %s63 = sphi 0, %s63
    %s65 = sphi 0, %s63
    %s66 = sphi 0, %s65
    %s80 = sphi 0, %s66
    %s84 = sphi 0, %s84
    %s86 = sphi 0, %s84
    %s87 = sphi 0, %s86
    %s101 = sphi 0, %s87
    %s105 = sphi 0, %s105
    %s107 = sphi 0, %s105
    %s108 = sphi 0, %s107
    %s122 = sphi 0, %s108
    %s126 = sphi 0, %s126
    %s128 = sphi 0, %s126
    %s129 = sphi 0, %s128
    %s143 = sphi 0, %s129
    %s149 = sphi 0, %s151
    %s152 = sphi 0, %s149
    %s153 = sphi 0, %s152
    %s169 = sphi 0, %s153
    %s175 = sphi 0, %s177
    %s178 = sphi 0, %s175
    %s179 = sphi 0, %s178
    %s195 = sphi 0, %s179
    %s201 = sphi 0, %s203
    %s204 = sphi 0, %s201
    %s205 = sphi 0, %s204
    %s221 = sphi 0, %s205
    %s227 = sphi 0, %s229
    %s230 = sphi 0, %s227
    %s231 = sphi 0, %s230
    %s247 = sphi 0, %s231
    %s255 = sphi 0, %s257
    %s258 = sphi 0, %s255
    %s259 = sphi 0, %s258
    %s275 = sphi 0, %s259
  $region4: #{mtlnet_forward.1} parent=0 // loop_header_branch
    %18 = sbr.rel (%p16) target = $region8
  $region5: #{mtlnet_forward.1} parent=0 // loop_body
    %s20 = ssub.s32 %s15, 1
    %s21 = ssub.s32 %s15, 2
    %s28 = sadd.s32 1, %s23
    %p29 = scmp.ge.s32.totalorder %s28, 1
    %s30 = scalar_select %p29, 0, %s28
    %s31 = sadd.s32 1, %s22
    %s32 = scalar_select %p29, %s31, %s22
    %p33 = scmp.ge.s32.totalorder %s32, 2
    %s34 = scalar_select %p33, 0, %s32
    %s35 = ssub.s32 %s22, %s34
    %s36 = ssub.s32 %s23, %s30
    %s37 = sor.u32 %s35, %s36
    %p38 = scmp.eq.s32.totalorder %s37, 0
    %s40 = sadd.s32 %s39, 1
    %s41 = scalar_select %p38, %s39, %s40
    %p44 = pneg %p38
    %p45 = scmp.eq.s32.totalorder %s15, 1
    %p46 = por %p44, %p45
    %p47 = scmp.ne.s32.totalorder %s39, %s42
    %p48 = scmp.eq.s32.totalorder %s15, 0
    %p49 = por %p47, %p48
    %p50 = scmp.ne.s32.totalorder %s39, %s42
    %p51 = scmp.eq.s32.totalorder %s20, 1
    %p52 = por %p50, %p51
    %p53 = scmp.ne.s32.totalorder %s42, %s43
    %p54 = scmp.eq.s32.totalorder %s20, 0
    %p55 = por %p53, %p54
    %p56 = scmp.ne.s32.totalorder %s42, %s43
    %p57 = scmp.eq.s32.totalorder %s21, 1
    %p58 = por %p56, %p57
    %p60 = scmp.ne.s32.totalorder %s43, %s59
    %p61 = scmp.eq.s32.totalorder %s21, 0
    %p62 = por %p60, %p61
    %s64 = sadd.s32 %s63, 1
    %p67 = scmp.eq.s32.totalorder %s15, 1
    %p68 = scmp.ne.s32.totalorder %s63, %s65
    %p69 = scmp.eq.s32.totalorder %s15, 0
    %p70 = por %p68, %p69
    %p71 = scmp.ne.s32.totalorder %s63, %s65
    %p72 = scmp.eq.s32.totalorder %s20, 1
    %p73 = por %p71, %p72
    %p74 = scmp.ne.s32.totalorder %s65, %s66
    %p75 = scmp.eq.s32.totalorder %s20, 0
    %p76 = por %p74, %p75
    %p77 = scmp.ne.s32.totalorder %s65, %s66
    %p78 = scmp.eq.s32.totalorder %s21, 1
    %p79 = por %p77, %p78
    %p81 = scmp.ne.s32.totalorder %s66, %s80
    %p82 = scmp.eq.s32.totalorder %s21, 0
    %p83 = por %p81, %p82
    %s85 = sadd.s32 %s84, 1
    %p88 = scmp.eq.s32.totalorder %s15, 1
    %p89 = scmp.ne.s32.totalorder %s84, %s86
    %p90 = scmp.eq.s32.totalorder %s15, 0
    %p91 = por %p89, %p90
    %p92 = scmp.ne.s32.totalorder %s84, %s86
    %p93 = scmp.eq.s32.totalorder %s20, 1
    %p94 = por %p92, %p93
    %p95 = scmp.ne.s32.totalorder %s86, %s87
    %p96 = scmp.eq.s32.totalorder %s20, 0
    %p97 = por %p95, %p96
    %p98 = scmp.ne.s32.totalorder %s86, %s87
    %p99 = scmp.eq.s32.totalorder %s21, 1
    %p100 = por %p98, %p99
    %p102 = scmp.ne.s32.totalorder %s87, %s101
    %p103 = scmp.eq.s32.totalorder %s21, 0
    %p104 = por %p102, %p103
    %s106 = sadd.s32 %s105, 1
    %p109 = scmp.eq.s32.totalorder %s15, 1
    %p110 = scmp.ne.s32.totalorder %s105, %s107
    %p111 = scmp.eq.s32.totalorder %s15, 0
    %p112 = por %p110, %p111
    %p113 = scmp.ne.s32.totalorder %s105, %s107
    %p114 = scmp.eq.s32.totalorder %s20, 1
    %p115 = por %p113, %p114
    %p116 = scmp.ne.s32.totalorder %s107, %s108
    %p117 = scmp.eq.s32.totalorder %s20, 0
    %p118 = por %p116, %p117
    %p119 = scmp.ne.s32.totalorder %s107, %s108
    %p120 = scmp.eq.s32.totalorder %s21, 1
    %p121 = por %p119, %p120
    %p123 = scmp.ne.s32.totalorder %s108, %s122
    %p124 = scmp.eq.s32.totalorder %s21, 0
    %p125 = por %p123, %p124
    %s127 = sadd.s32 %s126, 1
    %p130 = scmp.eq.s32.totalorder %s15, 1
    %p131 = scmp.ne.s32.totalorder %s126, %s128
    %p132 = scmp.eq.s32.totalorder %s15, 0
    %p133 = por %p131, %p132
    %p134 = scmp.ne.s32.totalorder %s126, %s128
    %p135 = scmp.eq.s32.totalorder %s20, 1
    %p136 = por %p134, %p135
    %p137 = scmp.ne.s32.totalorder %s128, %s129
    %p138 = scmp.eq.s32.totalorder %s20, 0
    %p139 = por %p137, %p138
    %p140 = scmp.ne.s32.totalorder %s128, %s129
    %p141 = scmp.eq.s32.totalorder %s21, 1
    %p142 = por %p140, %p141
    %p144 = scmp.ne.s32.totalorder %s129, %s143
    %p145 = scmp.eq.s32.totalorder %s21, 0
    %p146 = por %p144, %p145
    %s147 = ssub.s32 %s22, %s34
    %p148 = scmp.eq.s32.totalorder %s147, 0
    %s150 = sadd.s32 %s149, 1
    %s151 = scalar_select %p148, %s149, %s150
    %p154 = pneg %p148
    %p155 = scmp.eq.s32.totalorder %s15, 1
    %p156 = por %p154, %p155
    %p157 = scmp.ne.s32.totalorder %s149, %s152
    %p158 = scmp.eq.s32.totalorder %s15, 0
    %p159 = por %p157, %p158
    %p160 = scmp.ne.s32.totalorder %s149, %s152
    %p161 = scmp.eq.s32.totalorder %s20, 1
    %p162 = por %p160, %p161
    %p163 = scmp.ne.s32.totalorder %s152, %s153
    %p164 = scmp.eq.s32.totalorder %s20, 0
    %p165 = por %p163, %p164
    %p166 = scmp.ne.s32.totalorder %s152, %s153
    %p167 = scmp.eq.s32.totalorder %s21, 1
    %p168 = por %p166, %p167
    %p170 = scmp.ne.s32.totalorder %s153, %s169
    %p171 = scmp.eq.s32.totalorder %s21, 0
    %p172 = por %p170, %p171
    %s173 = ssub.s32 %s22, %s34
    %p174 = scmp.eq.s32.totalorder %s173, 0
    %s176 = sadd.s32 %s175, 1
    %s177 = scalar_select %p174, %s175, %s176
    %p180 = pneg %p174
    %p181 = scmp.eq.s32.totalorder %s15, 1
    %p182 = por %p180, %p181
    %p183 = scmp.ne.s32.totalorder %s175, %s178
    %p184 = scmp.eq.s32.totalorder %s15, 0
    %p185 = por %p183, %p184
    %p186 = scmp.ne.s32.totalorder %s175, %s178
    %p187 = scmp.eq.s32.totalorder %s20, 1
    %p188 = por %p186, %p187
    %p189 = scmp.ne.s32.totalorder %s178, %s179
    %p190 = scmp.eq.s32.totalorder %s20, 0
    %p191 = por %p189, %p190
    %p192 = scmp.ne.s32.totalorder %s178, %s179
    %p193 = scmp.eq.s32.totalorder %s21, 1
    %p194 = por %p192, %p193
    %p196 = scmp.ne.s32.totalorder %s179, %s195
    %p197 = scmp.eq.s32.totalorder %s21, 0
    %p198 = por %p196, %p197
    %s199 = ssub.s32 %s22, %s34
    %p200 = scmp.eq.s32.totalorder %s199, 0
    %s202 = sadd.s32 %s201, 1
    %s203 = scalar_select %p200, %s201, %s202
    %p206 = pneg %p200
    %p207 = scmp.eq.s32.totalorder %s15, 1
    %p208 = por %p206, %p207
    %p209 = scmp.ne.s32.totalorder %s201, %s204
    %p210 = scmp.eq.s32.totalorder %s15, 0
    %p211 = por %p209, %p210
    %p212 = scmp.ne.s32.totalorder %s201, %s204
    %p213 = scmp.eq.s32.totalorder %s20, 1
    %p214 = por %p212, %p213
    %p215 = scmp.ne.s32.totalorder %s204, %s205
    %p216 = scmp.eq.s32.totalorder %s20, 0
    %p217 = por %p215, %p216
    %p218 = scmp.ne.s32.totalorder %s204, %s205
    %p219 = scmp.eq.s32.totalorder %s21, 1
    %p220 = por %p218, %p219
    %p222 = scmp.ne.s32.totalorder %s205, %s221
    %p223 = scmp.eq.s32.totalorder %s21, 0
    %p224 = por %p222, %p223
    %s225 = ssub.s32 %s22, %s34
    %p226 = scmp.eq.s32.totalorder %s225, 0
    %s228 = sadd.s32 %s227, 1
    %s229 = scalar_select %p226, %s227, %s228
    %p232 = pneg %p226
    %p233 = scmp.eq.s32.totalorder %s15, 1
    %p234 = por %p232, %p233
    %p235 = scmp.ne.s32.totalorder %s227, %s230
    %p236 = scmp.eq.s32.totalorder %s15, 0
    %p237 = por %p235, %p236
    %p238 = scmp.ne.s32.totalorder %s227, %s230
    %p239 = scmp.eq.s32.totalorder %s20, 1
    %p240 = por %p238, %p239
    %p241 = scmp.ne.s32.totalorder %s230, %s231
    %p242 = scmp.eq.s32.totalorder %s20, 0
    %p243 = por %p241, %p242
    %p244 = scmp.ne.s32.totalorder %s230, %s231
    %p245 = scmp.eq.s32.totalorder %s21, 1
    %p246 = por %p244, %p245
    %p248 = scmp.ne.s32.totalorder %s231, %s247
    %p249 = scmp.eq.s32.totalorder %s21, 0
    %p250 = por %p248, %p249
    %s251 = ssub.s32 %s22, %s34
    %s252 = ssub.s32 %s23, %s30
    %s253 = sor.u32 %s251, %s252
    %p254 = scmp.eq.s32.totalorder %s253, 0
    %s256 = sadd.s32 %s255, 1
    %s257 = scalar_select %p254, %s255, %s256
    %p260 = pneg %p254
    %p261 = scmp.eq.s32.totalorder %s15, 1
    %p262 = por %p260, %p261
    %p263 = scmp.ne.s32.totalorder %s255, %s258
    %p264 = scmp.eq.s32.totalorder %s15, 0
    %p265 = por %p263, %p264
    %p266 = scmp.ne.s32.totalorder %s255, %s258
    %p267 = scmp.eq.s32.totalorder %s20, 1
    %p268 = por %p266, %p267
    %p269 = scmp.ne.s32.totalorder %s258, %s259
    %p270 = scmp.eq.s32.totalorder %s20, 0
    %p271 = por %p269, %p270
    %p272 = scmp.ne.s32.totalorder %s258, %s259
    %p273 = scmp.eq.s32.totalorder %s21, 1
    %p274 = por %p272, %p273
    %p276 = scmp.ne.s32.totalorder %s259, %s275
    %p277 = scmp.eq.s32.totalorder %s21, 0
    %p278 = por %p276, %p277
    %p279 = scmp.le.s32.totalorder 1, %s15
    %p280 = scmp.lt.s32.totalorder %s15, 3
    %p281 = pnand %p279, %p280
    %p282 = pneg %p281
    // Predicated region
    $region9: #{mtlnet_forward.1} parent=5 // pred_check
      _
    $region10: #{mtlnet_forward.1} parent=5 // pred_check_branch
      %284 = sbr.rel (%p281) target = $region12
    $region11: #{mtlnet_forward.1} parent=5 // pred_region
      %s285 = ssub.s32 %s15, 1
      // Predicated region
      $region13: #{mtlnet_forward.1} parent=11 // pred_check
        %p286 = pneg %p76
      $region14: #{mtlnet_forward.1} parent=11 // pred_check_branch
        %288 = sbr.rel (%p286) target = $region16
      $region15: #{mtlnet_forward.1} parent=11 // pred_region
        _
      $region16: #{mtlnet_forward.1} parent=11 // pred_fallthru
        _
      // Predicated region
      $region17: #{mtlnet_forward.1} parent=11 // pred_check
        %p289 = pneg %p97
      $region18: #{mtlnet_forward.1} parent=11 // pred_check_branch
        %291 = sbr.rel (%p289) target = $region20
      $region19: #{mtlnet_forward.1} parent=11 // pred_region
        _
      $region20: #{mtlnet_forward.1} parent=11 // pred_fallthru
        _
      // Predicated region
      $region21: #{mtlnet_forward.1} parent=11 // pred_check
        %p292 = pneg %p118
      $region22: #{mtlnet_forward.1} parent=11 // pred_check_branch
        %294 = sbr.rel (%p292) target = $region24
      $region23: #{mtlnet_forward.1} parent=11 // pred_region
        _
      $region24: #{mtlnet_forward.1} parent=11 // pred_fallthru
        _
      // Predicated region
      $region25: #{mtlnet_forward.1} parent=11 // pred_check
        %p295 = pneg %p139
      $region26: #{mtlnet_forward.1} parent=11 // pred_check_branch
        %297 = sbr.rel (%p295) target = $region28
      $region27: #{mtlnet_forward.1} parent=11 // pred_region
        _
      $region28: #{mtlnet_forward.1} parent=11 // pred_fallthru
        _
    $region12: #{mtlnet_forward.1} parent=5 // pred_fallthru
      _
    %p298 = scmp.lt.s32.totalorder %s15, 2
    // Predicated region
    $region29: #{mtlnet_forward.1} parent=5 // pred_check
      %p299 = pneg %p298
    $region30: #{mtlnet_forward.1} parent=5 // pred_check_branch
      %301 = sbr.rel (%p299) target = $region32
    $region31: #{mtlnet_forward.1} parent=5 // pred_region
      // Predicated region
      $region33: #{mtlnet_forward.1} parent=31 // pred_check
        %p302 = pneg %p49
      $region34: #{mtlnet_forward.1} parent=31 // pred_check_branch
        %304 = sbr.rel (%p302) target = $region36
      $region35: #{mtlnet_forward.1} parent=31 // pred_region
        %p305 = scmp.lt.s32.totalorder %s22, 1
        %s306 = scalar_select %p305, %s22, 1
        %p307 = scmp.lt.s32.totalorder %s23, 0
        %s308 = scalar_select %p307, %s23, 0
        %s309 = smul.addr %s306, 2
        %s310 = sadd.s32 %s308, %s309
        %s311 = smul.addr %s310, 8
        %s312 = scalar_lea.vmem %s0, %s311
      $region36: #{mtlnet_forward.1} parent=31 // pred_fallthru
        _
      // Predicated region
      $region37: #{mtlnet_forward.1} parent=31 // pred_check
        %p313 = pneg %p159
      $region38: #{mtlnet_forward.1} parent=31 // pred_check_branch
        %315 = sbr.rel (%p313) target = $region40
      $region39: #{mtlnet_forward.1} parent=31 // pred_region
        %p316 = scmp.lt.s32.totalorder %s22, 1
        %s317 = scalar_select %p316, %s22, 1
        %s318 = smul.addr %s317, 2
        %s319 = smul.addr %s318, 8
        %s320 = scalar_lea.vmem %s5, %s319
      $region40: #{mtlnet_forward.1} parent=31 // pred_fallthru
        _
      // Predicated region
      $region41: #{mtlnet_forward.1} parent=31 // pred_check
        %p321 = pneg %p185
      $region42: #{mtlnet_forward.1} parent=31 // pred_check_branch
        %323 = sbr.rel (%p321) target = $region44
      $region43: #{mtlnet_forward.1} parent=31 // pred_region
        %p324 = scmp.lt.s32.totalorder %s22, 1
        %s325 = scalar_select %p324, %s22, 1
        %s326 = smul.addr %s325, 2
        %s327 = smul.addr %s326, 8
        %s328 = scalar_lea.vmem %s6, %s327
      $region44: #{mtlnet_forward.1} parent=31 // pred_fallthru
        _
      // Predicated region
      $region45: #{mtlnet_forward.1} parent=31 // pred_check
        %p329 = pneg %p211
      $region46: #{mtlnet_forward.1} parent=31 // pred_check_branch
        %331 = sbr.rel (%p329) target = $region48
      $region47: #{mtlnet_forward.1} parent=31 // pred_region
        %p332 = scmp.lt.s32.totalorder %s22, 1
        %s333 = scalar_select %p332, %s22, 1
        %s334 = smul.addr %s333, 8
        %s335 = scalar_lea.vmem %s7, %s334
      $region48: #{mtlnet_forward.1} parent=31 // pred_fallthru
        _
      // Predicated region
      $region49: #{mtlnet_forward.1} parent=31 // pred_check
        %p336 = pneg %p237
      $region50: #{mtlnet_forward.1} parent=31 // pred_check_branch
        %338 = sbr.rel (%p336) target = $region52
      $region51: #{mtlnet_forward.1} parent=31 // pred_region
        %p339 = scmp.lt.s32.totalorder %s22, 1
        %s340 = scalar_select %p339, %s22, 1
        %s341 = smul.addr %s340, 8
        %s342 = scalar_lea.vmem %s8, %s341
      $region52: #{mtlnet_forward.1} parent=31 // pred_fallthru
        _
    $region32: #{mtlnet_forward.1} parent=5 // pred_fallthru
      _
    %p343 = scmp.le.s32.totalorder 1, %s15
    %p344 = scmp.lt.s32.totalorder %s15, 3
    %p345 = pnand %p343, %p344
    %p346 = pneg %p345
    // Predicated region
    $region53: #{mtlnet_forward.1} parent=5 // pred_check
      _
    $region54: #{mtlnet_forward.1} parent=5 // pred_check_branch
      %348 = sbr.rel (%p345) target = $region56
    $region55: #{mtlnet_forward.1} parent=5 // pred_region
      %s349 = ssub.s32 %s15, 1
      %p350 = scmp.lt.s32.totalorder %s24, 1
      %s351 = scalar_select %p350, %s24, 1
      %p352 = scmp.lt.s32.totalorder %s25, 0
      %s353 = scalar_select %p352, %s25, 0
      %s354 = smul.addr %s351, 2
      %s355 = sadd.s32 %s353, %s354
      %s356 = smul.addr %s355, 8
      %s357 = scalar_lea.vmem %s0, %s356
      %p358 = pneg %p55
      %p359 = pneg %p52
      %p360 = pneg %p76
      %p361 = pneg %p73
      %p362 = pneg %p97
      %p363 = pneg %p94
      %p364 = pneg %p118
      %p365 = pneg %p115
      %p366 = pneg %p139
      %p367 = pneg %p136
      %p368 = scmp.lt.s32.totalorder %s24, 1
      %s369 = scalar_select %p368, %s24, 1
      %s370 = smul.addr %s369, 2
      %s371 = smul.addr %s370, 8
      %s372 = scalar_lea.vmem %s5, %s371
      %p373 = pneg %p165
      %p374 = pneg %p162
      %p375 = scmp.lt.s32.totalorder %s24, 1
      %s376 = scalar_select %p375, %s24, 1
      %s377 = smul.addr %s376, 2
      %s378 = smul.addr %s377, 8
      %s379 = scalar_lea.vmem %s6, %s378
      %p380 = pneg %p191
      %p381 = pneg %p188
      %p382 = scmp.lt.s32.totalorder %s24, 1
      %s383 = scalar_select %p382, %s24, 1
      %s384 = smul.addr %s383, 8
      %s385 = scalar_lea.vmem %s7, %s384
      %p386 = pneg %p217
      %p387 = pneg %p214
      %p388 = scmp.lt.s32.totalorder %s24, 1
      %s389 = scalar_select %p388, %s24, 1
      %s390 = smul.addr %s389, 8
      %s391 = scalar_lea.vmem %s8, %s390
      %p392 = pneg %p243
      %p393 = pneg %p240
      %p394 = pneg %p271
      %p395 = pneg %p268
      %p396 = scmp.lt.s32.totalorder %s24, 1
      %s397 = scalar_select %p396, %s24, 1
      %p398 = scmp.lt.s32.totalorder %s25, 0
      %s399 = scalar_select %p398, %s25, 0
      %s400 = sadd.s32 %s399, %s397
      %s401 = smul.addr %s400, 8
      %s402 = scalar_lea.vmem %s9, %s401
      %p403 = scmp.lt.s32.totalorder %s24, 1
      %s404 = scalar_select %p403, %s24, 1
      %p405 = scmp.lt.s32.totalorder %s25, 0
      %s406 = scalar_select %p405, %s25, 0
      %s407 = smul.addr %s404, 2
      %s408 = sadd.s32 %s406, %s407
      %s409 = smul.addr %s408, 8
      %s410 = scalar_lea.vmem %s0, %s409
      %p411 = scmp.lt.s32.totalorder %s24, 1
      %s412 = scalar_select %p411, %s24, 1
      %s413 = smul.addr %s412, 2
      %s414 = smul.addr %s413, 8
      %s415 = scalar_lea.vmem %s5, %s414
      %p416 = scmp.lt.s32.totalorder %s24, 1
      %s417 = scalar_select %p416, %s24, 1
      %s418 = smul.addr %s417, 2
      %s419 = smul.addr %s418, 8
      %s420 = scalar_lea.vmem %s6, %s419
      %p421 = scmp.lt.s32.totalorder %s24, 1
      %s422 = scalar_select %p421, %s24, 1
      %s423 = smul.addr %s422, 8
      %s424 = scalar_lea.vmem %s7, %s423
      %p425 = scmp.lt.s32.totalorder %s24, 1
      %s426 = scalar_select %p425, %s24, 1
      %s427 = smul.addr %s426, 8
      %s428 = scalar_lea.vmem %s8, %s427
      %p429 = scmp.lt.s32.totalorder %s24, 1
      %s430 = scalar_select %p429, %s24, 1
      %p431 = scmp.lt.s32.totalorder %s25, 0
      %s432 = scalar_select %p431, %s25, 0
      %s433 = sadd.s32 %s432, %s430
      %s434 = smul.addr %s433, 8
      %s435 = scalar_lea.vmem %s9, %s434
      %v436 = vld [vmem:[%s410] sm:$0xff]
      %v437 = vld [vmem:[%s410 + $0x8] sm:$0xff]
      %v438 = vld [vmem:[%s1] sm:$0xff]
      %v439 = vld [vmem:[%s1 + $0x8] sm:$0xff]
      %v440 = vld [vmem:[%s1 + $0x10] sm:$0xff]
      %v441 = vld [vmem:[%s1 + $0x18] sm:$0xff]
      %v442 = vld [vmem:[%s2] sm:$0xff]
      %v443 = vld [vmem:[%s2 + $0x8] sm:$0xff]
      %v444 = vld [vmem:[%s2 + $0x10] sm:$0xff]
      %v445 = vld [vmem:[%s2 + $0x18] sm:$0xff]
      %447 = vset.pattern.permute.xlu0 0
      %448 = vperm.xlu0 %447, %v442
      %v449 = vpop.permute.xlu0 %448
      %452 = vset.pattern.permute.xlu0 0
      %453 = vperm.xlu0 %452, %v443
      %v454 = vpop.permute.xlu0 %453
      %457 = vset.pattern.permute.xlu0 0
      %458 = vperm.xlu0 %457, %v444
      %v459 = vpop.permute.xlu0 %458
      %462 = vset.pattern.permute.xlu0 0
      %463 = vperm.xlu0 %462, %v445
      %v464 = vpop.permute.xlu0 %463
      %vm466 = vcmask 130048
      %v468 = vsel %vm466, %v438, 0
      %v471 = vsel %vm466, %v439, 0
      %v474 = vsel %vm466, %v440, 0
      %v477 = vsel %vm466, %v441, 0
      %479 = vmatprep.subr.mxu0 0.0
      %480 = vmatpush1.msra.mxu0 0.0
      %481 = vmatprep.subr.mxu0 0.0
      %482 = vmatpush1.msra.mxu0 0.0
      %483 = vmatprep.subr.mxu0 0.0
      %484 = vmatpush1.msra.mxu0 0.0
      %485 = vmatprep.subr.mxu0 0.0
      %486 = vmatpush1.msra.mxu0 0.0
      %487 = vmatprep.subr.mxu0 0.0
      %488 = vmatpush1.msra.mxu0 0.0
      %489 = vmatprep.subr.mxu0 0.0
      %490 = vmatpush1.msra.mxu0 0.0
      %491 = vmatprep.subr.mxu0 0.0
      %492 = vmatpush1.msra.mxu0 0.0
      %493 = vmatprep.subr.mxu0 0.0
      %494 = vmatpush1.msra.mxu0 0.0
      %495 = vmatprep.subr.mxu0 0.0
      %496 = vmatpush1.msra.mxu0 0.0
      %497 = vmatprep.subr.mxu0 0.0
      %498 = vmatpush1.msra.mxu0 0.0
      %499 = vmatprep.subr.mxu0 0.0
      %500 = vmatpush1.msra.mxu0 0.0
      %501 = vmatprep.subr.mxu0 0.0
      %502 = vmatpush1.msra.mxu0 0.0
      %503 = vmatprep.subr.mxu0 0.0
      %504 = vmatpush1.msra.mxu0 0.0
      %505 = vmatprep.subr.mxu0 0.0
      %506 = vmatpush1.msra.mxu0 0.0
      %507 = vmatprep.subr.mxu0 0.0
      %508 = vmatpush1.msra.mxu0 %v437
      %509 = vmatprep.subr.mxu0 0.0
      %510 = vmatpush1.msra.mxu0 %v436
      %511 = vmatprep.subr.mxu0 0.0
      %512 = vmatpush2.msra.mxu0 0.0
      %513 = vmatprep.subr.mxu0 0.0
      %514 = vmatpush2.msra.mxu0 0.0
      %515 = vmatprep.subr.mxu0 0.0
      %516 = vmatpush2.msra.mxu0 0.0
      %517 = vmatprep.subr.mxu0 0.0
      %518 = vmatpush2.msra.mxu0 0.0
      %519 = vmatprep.subr.mxu0 0.0
      %520 = vmatpush2.msra.mxu0 0.0
      %521 = vmatprep.subr.mxu0 0.0
      %522 = vmatpush2.msra.mxu0 0.0
      %523 = vmatprep.subr.mxu0 0.0
      %524 = vmatpush2.msra.mxu0 0.0
      %525 = vmatprep.subr.mxu0 0.0
      %526 = vmatpush2.msra.mxu0 0.0
      %527 = vmatprep.subr.mxu0 0.0
      %528 = vmatpush2.msra.mxu0 0.0
      %529 = vmatprep.subr.mxu0 0.0
      %530 = vmatpush2.msra.mxu0 0.0
      %531 = vmatprep.subr.mxu0 0.0
      %532 = vmatpush2.msra.mxu0 0.0
      %533 = vmatprep.subr.mxu0 0.0
      %534 = vmatpush2.msra.mxu0 0.0
      %535 = vmatprep.subr.mxu0 0.0
      %536 = vmatpush2.msra.mxu0 0.0
      %537 = vmatprep.subr.mxu0 0.0
      %538 = vmatpush2.msra.mxu0 0.0
      %539 = vmatprep.subr.mxu0 0.0
      %540 = vmatpush2.msra.mxu0 0.0
      %541 = vmatprep.subr.mxu0 0.0
      %542 = vmatpush2.msra.mxu0 0.0
      %543 = vmatprep.mubr.f32.mxu0 0.0
      %544 = vmatmul.mubr.f32.gmra.mxu0 %v468
      %v545 = vpop.f32.mrf.mxu0
      %v546 = vadd.f32 %v449, %v545
      %v547 = vpop.f32.mrf.mxu0
      %548 = vmatprep.mubr.f32.mxu0 0.0
      %549 = vmatmul.mubr.f32.gmra.mxu0 %v471
      %v550 = vpop.f32.mrf.mxu0
      %v551 = vadd.f32 %v454, %v550
      %v552 = vpop.f32.mrf.mxu0
      %553 = vmatprep.mubr.f32.mxu0 0.0
      %554 = vmatmul.mubr.f32.gmra.mxu0 %v474
      %v555 = vpop.f32.mrf.mxu0
      %v556 = vadd.f32 %v459, %v555
      %v557 = vpop.f32.mrf.mxu0
      %558 = vmatprep.mubr.f32.mxu0 0.0
      %559 = vmatmul.mubr.f32.gmra.mxu0 %v477
      %v560 = vpop.f32.mrf.mxu0
      %v561 = vadd.f32 %v464, %v560
      %v562 = vpop.f32.mrf.mxu0
      %563 = vdwg.mxu0
      %v564 = vsub.f32 0.0, %v546
      %v565 = vsub.f32 0.0, %v551
      %v566 = vsub.f32 0.0, %v556
      %v567 = vsub.f32 0.0, %v561
      %v568 = vmul.f32 %v564, 1.442695
      %v569 = vpow.pop %v568
      %v570 = vmul.f32 %v565, 1.442695
      %v571 = vpow.pop %v570
      %v572 = vmul.f32 %v566, 1.442695
      %v573 = vpow.pop %v572
      %v574 = vmul.f32 %v567, 1.442695
      %v575 = vpow.pop %v574
      %v576 = vadd.f32 %v569, 1.0
      %v577 = vadd.f32 %v571, 1.0
      %v578 = vadd.f32 %v573, 1.0
      %v579 = vadd.f32 %v575, 1.0
      %v580 = vrcp.pop %v576
      %v581 = vrcp.pop %v577
      %v582 = vrcp.pop %v578
      %v583 = vrcp.pop %v579
      %v584 = vld [vmem:[%s3] sm:$0xff]
      %v585 = vld [vmem:[%s3 + $0x8] sm:$0xff]
      %v586 = vld [vmem:[%s3 + $0x10] sm:$0xff]
      %v587 = vld [vmem:[%s3 + $0x18] sm:$0xff]
      %v588 = vld [vmem:[%s4] sm:$0xff]
      %v589 = vld [vmem:[%s4 + $0x8] sm:$0xff]
      %v590 = vld [vmem:[%s4 + $0x10] sm:$0xff]
      %v591 = vld [vmem:[%s4 + $0x18] sm:$0xff]
      %593 = vset.pattern.permute.xlu0 0
      %594 = vperm.xlu0 %593, %v588
      %v595 = vpop.permute.xlu0 %594
      %598 = vset.pattern.permute.xlu0 0
      %599 = vperm.xlu0 %598, %v589
      %v600 = vpop.permute.xlu0 %599
      %603 = vset.pattern.permute.xlu0 0
      %604 = vperm.xlu0 %603, %v590
      %v605 = vpop.permute.xlu0 %604
      %608 = vset.pattern.permute.xlu0 0
      %609 = vperm.xlu0 %608, %v591
      %v610 = vpop.permute.xlu0 %609
      %vm612 = vcmask 261120
      %v614 = vsel %vm612, %v584, 0
      %v617 = vsel %vm612, %v585, 0
      %v620 = vsel %vm612, %v586, 0
      %v623 = vsel %vm612, %v587, 0
      %625 = vmatprep.subr.mxu0 0.0
      %626 = vmatpush1.msra.mxu0 0.0
      %627 = vmatprep.subr.mxu0 0.0
      %628 = vmatpush1.msra.mxu0 0.0
      %629 = vmatprep.subr.mxu0 0.0
      %630 = vmatpush1.msra.mxu0 0.0
      %631 = vmatprep.subr.mxu0 0.0
      %632 = vmatpush1.msra.mxu0 0.0
      %633 = vmatprep.subr.mxu0 0.0
      %634 = vmatpush1.msra.mxu0 0.0
      %635 = vmatprep.subr.mxu0 0.0
      %636 = vmatpush1.msra.mxu0 0.0
      %637 = vmatprep.subr.mxu0 0.0
      %638 = vmatpush1.msra.mxu0 0.0
      %639 = vmatprep.subr.mxu0 0.0
      %640 = vmatpush1.msra.mxu0 0.0
      %641 = vmatprep.subr.mxu0 0.0
      %642 = vmatpush1.msra.mxu0 0.0
      %643 = vmatprep.subr.mxu0 0.0
      %644 = vmatpush1.msra.mxu0 0.0
      %645 = vmatprep.subr.mxu0 0.0
      %646 = vmatpush1.msra.mxu0 0.0
      %647 = vmatprep.subr.mxu0 0.0
      %648 = vmatpush1.msra.mxu0 0.0
      %649 = vmatprep.subr.mxu0 0.0
      %650 = vmatpush1.msra.mxu0 %v583
      %651 = vmatprep.subr.mxu0 0.0
      %652 = vmatpush1.msra.mxu0 %v582
      %653 = vmatprep.subr.mxu0 0.0
      %654 = vmatpush1.msra.mxu0 %v581
      %655 = vmatprep.subr.mxu0 0.0
      %656 = vmatpush1.msra.mxu0 %v580
      %657 = vmatprep.subr.mxu0 0.0
      %658 = vmatpush2.msra.mxu0 0.0
      %659 = vmatprep.subr.mxu0 0.0
      %660 = vmatpush2.msra.mxu0 0.0
      %661 = vmatprep.subr.mxu0 0.0
      %662 = vmatpush2.msra.mxu0 0.0
      %663 = vmatprep.subr.mxu0 0.0
      %664 = vmatpush2.msra.mxu0 0.0
      %665 = vmatprep.subr.mxu0 0.0
      %666 = vmatpush2.msra.mxu0 0.0
      %667 = vmatprep.subr.mxu0 0.0
      %668 = vmatpush2.msra.mxu0 0.0
      %669 = vmatprep.subr.mxu0 0.0
      %670 = vmatpush2.msra.mxu0 0.0
      %671 = vmatprep.subr.mxu0 0.0
      %672 = vmatpush2.msra.mxu0 0.0
      %673 = vmatprep.subr.mxu0 0.0
      %674 = vmatpush2.msra.mxu0 0.0
      %675 = vmatprep.subr.mxu0 0.0
      %676 = vmatpush2.msra.mxu0 0.0
      %677 = vmatprep.subr.mxu0 0.0
      %678 = vmatpush2.msra.mxu0 0.0
      %679 = vmatprep.subr.mxu0 0.0
      %680 = vmatpush2.msra.mxu0 0.0
      %681 = vmatprep.subr.mxu0 0.0
      %682 = vmatpush2.msra.mxu0 0.0
      %683 = vmatprep.subr.mxu0 0.0
      %684 = vmatpush2.msra.mxu0 0.0
      %685 = vmatprep.subr.mxu0 0.0
      %686 = vmatpush2.msra.mxu0 0.0
      %687 = vmatprep.subr.mxu0 0.0
      %688 = vmatpush2.msra.mxu0 0.0
      %689 = vmatprep.mubr.f32.mxu0 0.0
      %690 = vmatmul.mubr.f32.gmra.mxu0 %v614
      %v691 = vpop.f32.mrf.mxu0
      %v692 = vadd.f32 %v595, %v691
      %v693 = vpop.f32.mrf.mxu0
      %694 = vmatprep.mubr.f32.mxu0 0.0
      %695 = vmatmul.mubr.f32.gmra.mxu0 %v617
      %v696 = vpop.f32.mrf.mxu0
      %v697 = vadd.f32 %v600, %v696
      %v698 = vpop.f32.mrf.mxu0
      %699 = vmatprep.mubr.f32.mxu0 0.0
      %700 = vmatmul.mubr.f32.gmra.mxu0 %v620
      %v701 = vpop.f32.mrf.mxu0
      %v702 = vadd.f32 %v605, %v701
      %v703 = vpop.f32.mrf.mxu0
      %704 = vmatprep.mubr.f32.mxu0 0.0
      %705 = vmatmul.mubr.f32.gmra.mxu0 %v623
      %v706 = vpop.f32.mrf.mxu0
      %v707 = vadd.f32 %v610, %v706
      %v708 = vpop.f32.mrf.mxu0
      %709 = vdwg.mxu0
      %v710 = vsub.f32 0.0, %v692
      %v711 = vsub.f32 0.0, %v697
      %v712 = vsub.f32 0.0, %v702
      %v713 = vsub.f32 0.0, %v707
      %v714 = vmul.f32 %v710, 1.442695
      %v715 = vpow.pop %v714
      %v716 = vmul.f32 %v711, 1.442695
      %v717 = vpow.pop %v716
      %v718 = vmul.f32 %v712, 1.442695
      %v719 = vpow.pop %v718
      %v720 = vmul.f32 %v713, 1.442695
      %v721 = vpow.pop %v720
      %v722 = vadd.f32 %v715, 1.0
      %v723 = vadd.f32 %v717, 1.0
      %v724 = vadd.f32 %v719, 1.0
      %v725 = vadd.f32 %v721, 1.0
      %v726 = vrcp.pop %v722
      %v727 = vrcp.pop %v723
      %v728 = vrcp.pop %v724
      %v729 = vrcp.pop %v725
      %v730 = vld [vmem:[%s415] sm:$0xff]
      %v731 = vld [vmem:[%s415 + $0x8] sm:$0xff]
      %v732 = vld [vmem:[%s420] sm:$0xff]
      %v733 = vld [vmem:[%s420 + $0x8] sm:$0xff]
      %735 = vset.pattern.permute.xlu0 0
      %736 = vperm.xlu0 %735, %v732
      %v737 = vpop.permute.xlu0 %736
      %740 = vset.pattern.permute.xlu0 0
      %741 = vperm.xlu0 %740, %v733
      %v742 = vpop.permute.xlu0 %741
      %v745 = vsel %vm612, %v730, 0
      %v748 = vsel %vm612, %v731, 0
      %750 = vmatprep.subr.mxu0 0.0
      %751 = vmatpush1.msra.mxu0 0.0
      %752 = vmatprep.subr.mxu0 0.0
      %753 = vmatpush1.msra.mxu0 0.0
      %754 = vmatprep.subr.mxu0 0.0
      %755 = vmatpush1.msra.mxu0 0.0
      %756 = vmatprep.subr.mxu0 0.0
      %757 = vmatpush1.msra.mxu0 0.0
      %758 = vmatprep.subr.mxu0 0.0
      %759 = vmatpush1.msra.mxu0 0.0
      %760 = vmatprep.subr.mxu0 0.0
      %761 = vmatpush1.msra.mxu0 0.0
      %762 = vmatprep.subr.mxu0 0.0
      %763 = vmatpush1.msra.mxu0 0.0
      %764 = vmatprep.subr.mxu0 0.0
      %765 = vmatpush1.msra.mxu0 0.0
      %766 = vmatprep.subr.mxu0 0.0
      %767 = vmatpush1.msra.mxu0 0.0
      %768 = vmatprep.subr.mxu0 0.0
      %769 = vmatpush1.msra.mxu0 0.0
      %770 = vmatprep.subr.mxu0 0.0
      %771 = vmatpush1.msra.mxu0 0.0
      %772 = vmatprep.subr.mxu0 0.0
      %773 = vmatpush1.msra.mxu0 0.0
      %774 = vmatprep.subr.mxu0 0.0
      %775 = vmatpush1.msra.mxu0 %v729
      %776 = vmatprep.subr.mxu0 0.0
      %777 = vmatpush1.msra.mxu0 %v728
      %778 = vmatprep.subr.mxu0 0.0
      %779 = vmatpush1.msra.mxu0 %v727
      %780 = vmatprep.subr.mxu0 0.0
      %781 = vmatpush1.msra.mxu0 %v726
      %782 = vmatprep.subr.mxu0 0.0
      %783 = vmatpush2.msra.mxu0 0.0
      %784 = vmatprep.subr.mxu0 0.0
      %785 = vmatpush2.msra.mxu0 0.0
      %786 = vmatprep.subr.mxu0 0.0
      %787 = vmatpush2.msra.mxu0 0.0
      %788 = vmatprep.subr.mxu0 0.0
      %789 = vmatpush2.msra.mxu0 0.0
      %790 = vmatprep.subr.mxu0 0.0
      %791 = vmatpush2.msra.mxu0 0.0
      %792 = vmatprep.subr.mxu0 0.0
      %793 = vmatpush2.msra.mxu0 0.0
      %794 = vmatprep.subr.mxu0 0.0
      %795 = vmatpush2.msra.mxu0 0.0
      %796 = vmatprep.subr.mxu0 0.0
      %797 = vmatpush2.msra.mxu0 0.0
      %798 = vmatprep.subr.mxu0 0.0
      %799 = vmatpush2.msra.mxu0 0.0
      %800 = vmatprep.subr.mxu0 0.0
      %801 = vmatpush2.msra.mxu0 0.0
      %802 = vmatprep.subr.mxu0 0.0
      %803 = vmatpush2.msra.mxu0 0.0
      %804 = vmatprep.subr.mxu0 0.0
      %805 = vmatpush2.msra.mxu0 0.0
      %806 = vmatprep.subr.mxu0 0.0
      %807 = vmatpush2.msra.mxu0 0.0
      %808 = vmatprep.subr.mxu0 0.0
      %809 = vmatpush2.msra.mxu0 0.0
      %810 = vmatprep.subr.mxu0 0.0
      %811 = vmatpush2.msra.mxu0 0.0
      %812 = vmatprep.subr.mxu0 0.0
      %813 = vmatpush2.msra.mxu0 0.0
      %814 = vmatprep.mubr.f32.mxu0 0.0
      %815 = vmatmul.mubr.f32.gmra.mxu0 %v745
      %v816 = vpop.f32.mrf.mxu0
      %v817 = vadd.f32 %v737, %v816
      %v818 = vpop.f32.mrf.mxu0
      %819 = vmatprep.mubr.f32.mxu0 0.0
      %820 = vmatmul.mubr.f32.gmra.mxu0 %v748
      %v821 = vpop.f32.mrf.mxu0
      %v822 = vadd.f32 %v742, %v821
      %v823 = vpop.f32.mrf.mxu0
      %824 = vdwg.mxu0
      %v825 = vsub.f32 0.0, %v817
      %v826 = vsub.f32 0.0, %v822
      %v827 = vmul.f32 %v825, 1.442695
      %v828 = vpow.pop %v827
      %v829 = vmul.f32 %v826, 1.442695
      %v830 = vpow.pop %v829
      %v831 = vadd.f32 %v828, 1.0
      %v832 = vadd.f32 %v830, 1.0
      %v833 = vrcp.pop %v831
      %v834 = vrcp.pop %v832
      %v835 = vld [vmem:[%s424] sm:$0xff]
      %v836 = vld [vmem:[%s428] sm:$0xff]
      %838 = vset.pattern.permute.xlu0 0
      %839 = vperm.xlu0 %838, %v836
      %v840 = vpop.permute.xlu0 %839
      %v843 = vsel %vm466, %v835, 0
      %845 = vmatprep.subr.mxu0 0.0
      %846 = vmatpush1.msra.mxu0 0.0
      %847 = vmatprep.subr.mxu0 0.0
      %848 = vmatpush1.msra.mxu0 0.0
      %849 = vmatprep.subr.mxu0 0.0
      %850 = vmatpush1.msra.mxu0 0.0
      %851 = vmatprep.subr.mxu0 0.0
      %852 = vmatpush1.msra.mxu0 0.0
      %853 = vmatprep.subr.mxu0 0.0
      %854 = vmatpush1.msra.mxu0 0.0
      %855 = vmatprep.subr.mxu0 0.0
      %856 = vmatpush1.msra.mxu0 0.0
      %857 = vmatprep.subr.mxu0 0.0
      %858 = vmatpush1.msra.mxu0 0.0
      %859 = vmatprep.subr.mxu0 0.0
      %860 = vmatpush1.msra.mxu0 0.0
      %861 = vmatprep.subr.mxu0 0.0
      %862 = vmatpush1.msra.mxu0 0.0
      %863 = vmatprep.subr.mxu0 0.0
      %864 = vmatpush1.msra.mxu0 0.0
      %865 = vmatprep.subr.mxu0 0.0
      %866 = vmatpush1.msra.mxu0 0.0
      %867 = vmatprep.subr.mxu0 0.0
      %868 = vmatpush1.msra.mxu0 0.0
      %869 = vmatprep.subr.mxu0 0.0
      %870 = vmatpush1.msra.mxu0 0.0
      %871 = vmatprep.subr.mxu0 0.0
      %872 = vmatpush1.msra.mxu0 0.0
      %873 = vmatprep.subr.mxu0 0.0
      %874 = vmatpush1.msra.mxu0 %v834
      %875 = vmatprep.subr.mxu0 0.0
      %876 = vmatpush1.msra.mxu0 %v833
      %877 = vmatprep.subr.mxu0 0.0
      %878 = vmatpush2.msra.mxu0 0.0
      %879 = vmatprep.subr.mxu0 0.0
      %880 = vmatpush2.msra.mxu0 0.0
      %881 = vmatprep.subr.mxu0 0.0
      %882 = vmatpush2.msra.mxu0 0.0
      %883 = vmatprep.subr.mxu0 0.0
      %884 = vmatpush2.msra.mxu0 0.0
      %885 = vmatprep.subr.mxu0 0.0
      %886 = vmatpush2.msra.mxu0 0.0
      %887 = vmatprep.subr.mxu0 0.0
      %888 = vmatpush2.msra.mxu0 0.0
      %889 = vmatprep.subr.mxu0 0.0
      %890 = vmatpush2.msra.mxu0 0.0
      %891 = vmatprep.subr.mxu0 0.0
      %892 = vmatpush2.msra.mxu0 0.0
      %893 = vmatprep.subr.mxu0 0.0
      %894 = vmatpush2.msra.mxu0 0.0
      %895 = vmatprep.subr.mxu0 0.0
      %896 = vmatpush2.msra.mxu0 0.0
      %897 = vmatprep.subr.mxu0 0.0
      %898 = vmatpush2.msra.mxu0 0.0
      %899 = vmatprep.subr.mxu0 0.0
      %900 = vmatpush2.msra.mxu0 0.0
      %901 = vmatprep.subr.mxu0 0.0
      %902 = vmatpush2.msra.mxu0 0.0
      %903 = vmatprep.subr.mxu0 0.0
      %904 = vmatpush2.msra.mxu0 0.0
      %905 = vmatprep.subr.mxu0 0.0
      %906 = vmatpush2.msra.mxu0 0.0
      %907 = vmatprep.subr.mxu0 0.0
      %908 = vmatpush2.msra.mxu0 0.0
      %909 = vmatprep.mubr.f32.mxu0 0.0
      %910 = vmatmul.mubr.f32.gmra.mxu0 %v843
      %v911 = vpop.f32.mrf.mxu0
      %v912 = vadd.f32 %v840, %v911
      %v913 = vpop.f32.mrf.mxu0
      %914 = vdwg.mxu0
      %915 = vst [vmem:[%s435] sm:$0xff] %v912
      %p916 = scmp.lt.s32.totalorder %s24, 1
      %s917 = scalar_select %p916, %s24, 1
      %p918 = scmp.lt.s32.totalorder %s25, 0
      %s919 = scalar_select %p918, %s25, 0
      %s920 = sadd.s32 %s919, %s917
      %s921 = smul.addr %s920, 8
      %s922 = scalar_lea.vmem %s9, %s921
      // Predicated region
      $region57: #{mtlnet_forward.1} parent=55 // pred_check
        %p923 = pneg %p268
      $region58: #{mtlnet_forward.1} parent=55 // pred_check_branch
        %925 = sbr.rel (%p923) target = $region60
      $region59: #{mtlnet_forward.1} parent=55 // pred_region
        _
      $region60: #{mtlnet_forward.1} parent=55 // pred_fallthru
        _
    $region56: #{mtlnet_forward.1} parent=5 // pred_fallthru
      _
    %p926 = scmp.le.s32.totalorder 2, %s15
    // Predicated region
    $region61: #{mtlnet_forward.1} parent=5 // pred_check
      %p927 = pneg %p926
    $region62: #{mtlnet_forward.1} parent=5 // pred_check_branch
      %929 = sbr.rel (%p927) target = $region64
    $region63: #{mtlnet_forward.1} parent=5 // pred_region
      %s930 = ssub.s32 %s15, 2
      // Predicated region
      $region65: #{mtlnet_forward.1} parent=63 // pred_check
        %p931 = pneg %p274
      $region66: #{mtlnet_forward.1} parent=63 // pred_check_branch
        %933 = sbr.rel (%p931) target = $region68
      $region67: #{mtlnet_forward.1} parent=63 // pred_region
        %p934 = scmp.lt.s32.totalorder %s26, 1
        %s935 = scalar_select %p934, %s26, 1
        %p936 = scmp.lt.s32.totalorder %s27, 0
        %s937 = scalar_select %p936, %s27, 0
        %s938 = sadd.s32 %s937, %s935
        %s939 = smul.addr %s938, 8
        %s940 = scalar_lea.vmem %s9, %s939
      $region68: #{mtlnet_forward.1} parent=63 // pred_fallthru
        _
    $region64: #{mtlnet_forward.1} parent=5 // pred_fallthru
      _
  $region6: #{mtlnet_forward.1} parent=0 // loop_footer
    %s19 = sadd.s32 1, %s15
  $region7: #{mtlnet_forward.1} parent=0 // loop_footer_branch
    %14 = sbr.rel target = $region3
  $region8: #{mtlnet_forward.1} parent=0 // loop_exit
    _

</llo_original>
